<compile_context>
chip_gen: v7x
topology: tpu7x:2x2x1
jax: 0.10.0
libtpu: 0.0.40
codegen_flags: <defaults>
</compile_context>

<pallas_src>
import jax
import jax.numpy as jnp
from jax import lax
from jax.experimental import pallas as pl
from jax.experimental.pallas import tpu as pltpu


def mlp_attention_kernel(x_ref, w_ref, bw_ref, wv_ref, o_ref):
    """One grid step: a block of `block_b` batch rows.

    x_ref:  (Bblk, S, Hd)  input block (native dtype; f32 or bf16)
    w_ref:  (A, Hd)        proj_w.weight in torch layout (consumed directly)
    bw_ref: (1, A)         proj_w.bias
    wv_ref: (1, A)         proj_v.weight (out_features=1, no bias)
    o_ref:  (Bblk, Hd)     output block
    """
    bblk, s, hd = x_ref.shape
    a = w_ref.shape[0]

    xs = x_ref[...]                          # native dtype -> bf16 MXU path if bf16
    x3 = xs.astype(jnp.float32)              # softmax / weighted sum in f32

    # H = tanh(x @ W^T + b): one (Bblk*S, Hd) x (A, Hd)^T MXU matmul.
    if s % 8 == 0:
        # (Bblk, S) -> Bblk*S fold stays a view when S is sublane(8)-aligned.
        x2 = xs.reshape(bblk * s, hd)
        h2 = lax.dot_general(
            x2, w_ref[...],
            dimension_numbers=(((1,), (1,)), ((), ())),   # contract Hd (trans_b)
            preferred_element_type=jnp.float32)
        h3 = jnp.tanh(h2 + bw_ref[...]).reshape(bblk, s, a)          # (Bblk,S,A)
    else:
        # Non-8-divisible S: skip the flatten (it would materialize an extra
        # VMEM copy of the x block) and contract the 3-D block directly.
        h3 = jnp.tanh(
            lax.dot_general(
                xs, w_ref[...],
                dimension_numbers=(((2,), (1,)), ((), ())),
                preferred_element_type=jnp.float32)
            + bw_ref[...])                                           # (Bblk,S,A)

    # scores lane-major (Bblk, S): softmax over the seq axis == lane reduces.
    scores = jnp.sum(h3 * wv_ref[...], axis=-1)                      # (Bblk, S)
    m = jnp.max(scores, axis=-1, keepdims=True)                      # (Bblk, 1)
    e = jnp.exp(scores - m)                                          # (Bblk, S)
    denom = jnp.sum(e, axis=-1, keepdims=True)                       # (Bblk, 1)
    att = e / denom          # exact divide; denom is tiny, approx recip buys nothing

    # attn_x = sum_s x * att: VPU multiply + XLU sublane reduce (no M=1 matmuls).
    o_ref[...] = jnp.sum(x3 * att[:, :, None], axis=1).astype(o_ref.dtype)


def _tpu_vmem_and_cores():
    """Best-effort generation query; falls back to v7x-conservative defaults."""
    vmem_cap = 64 << 20           # v7x per-TensorCore VMEM (smallest generation)
    num_tc = 1
    try:
        info = pltpu.get_tpu_info()
        vmem_cap = int(getattr(info, "vmem_capacity_bytes", vmem_cap)) or vmem_cap
        num_tc = int(getattr(info, "num_cores", num_tc) or num_tc)
    except Exception:
        pass
    try:
        num_tc = max(num_tc, int(getattr(jax.devices()[0], "num_cores", 1) or 1))
    except Exception:
        pass
    return vmem_cap, num_tc


def _per_batch_vmem_bytes(S, Hd, A, x_bytes):
    # Double-buffered x / out blocks plus in-kernel intermediates.
    return (2 * S * Hd * x_bytes      # x block, double-buffered
            + 2 * Hd * 4              # output block, double-buffered
            + 2 * S * A * 4           # H and tanh temp
            + S * Hd * 4              # x*att product / potential reshape copy
            + 16 * S * 4)             # scores / exp / att vectors + slack


def _weight_vmem_bytes(Hd, A):
    return 2 * (A * Hd + 2 * A) * 4   # resident weight blocks (assume 2 buffers)


def _choose_block_b(B, S, Hd, A, x_bytes, vmem_cap, num_tc):
    budget = vmem_cap // 4            # ~32 MiB on v5e/v6e (128 MiB), ~16 MiB on v7x
    per_b = _per_batch_vmem_bytes(S, Hd, A, x_bytes)
    bb = max(1, (budget - _weight_vmem_bytes(Hd, A)) // per_b)
    if num_tc > 1 and B >= 16:
        # Keep >= num_tc grid steps so every TensorCore on the chip gets work.
        bb = min(bb, max(8, ((-(-B // num_tc) + 7) // 8) * 8))
    if bb >= B:
        return B                      # one exact block, no ragged masking
    bb = max(8, (bb // 8) * 8)        # 8-divisible -> sublane-dense output stores
    # TODO(synk): if even 8 rows of (S, Hd) exceed the budget (very large S*Hd),
    # add an S grid axis ("arbitrary") with an online-softmax accumulator
    # instead of relying on the raised vmem_limit below.
    return bb


def mlp_attention(x, w_w, b_w, w_v, *, block_b=None):
    """
    x:   (B, S, Hd) float32 (or bfloat16 for halved HBM traffic)
    w_w: (A, Hd)    proj_w.weight (torch nn.Linear layout)
    b_w: (A,)       proj_w.bias
    w_v: (1, A)     proj_v.weight (out_features=1, no bias)
    returns (B, Hd) float32
    """
    B, S, Hd = x.shape
    A = w_w.shape[0]
    x_bytes = jnp.dtype(x.dtype).itemsize

    vmem_cap, num_tc = _tpu_vmem_and_cores()
    if block_b is None:
        block_b = _choose_block_b(B, S, Hd, A, x_bytes, vmem_cap, num_tc)
    grid_b = pl.cdiv(B, block_b)      # ragged last block; no wrapper-side pad of x

    footprint = (_weight_vmem_bytes(Hd, A)
                 + block_b * _per_batch_vmem_bytes(S, Hd, A, x_bytes))
    vmem_limit = int(min((3 * vmem_cap) // 4, max(2 * footprint, 32 << 20)))

    bw_row = b_w.reshape(1, A)
    wv_row = w_v.reshape(1, A)

    return pl.pallas_call(
        mlp_attention_kernel,
        out_shape=jax.ShapeDtypeStruct((B, Hd), jnp.float32),
        grid_spec=pltpu.PrefetchScalarGridSpec(
            num_scalar_prefetch=0,
            grid=(grid_b,),
            in_specs=[
                pl.BlockSpec((block_b, S, Hd), lambda b: (b, 0, 0)),
                # Weights: constant index_map -> DMA'd once, resident across grid.
                pl.BlockSpec((A, Hd), lambda b: (0, 0)),
                pl.BlockSpec((1, A), lambda b: (0, 0)),
                pl.BlockSpec((1, A), lambda b: (0, 0)),
            ],
            out_specs=pl.BlockSpec((block_b, Hd), lambda b: (b, 0)),
        ),
        compiler_params=pltpu.CompilerParams(
            dimension_semantics=("parallel",),
            vmem_limit_bytes=vmem_limit,
        ),
    )(x, w_w, bw_row, wv_row)


def mlp_attention_ref(x, w_w, b_w, w_v):
    """Pure-JAX reference for correctness check."""
    h = jnp.tanh(jnp.einsum("bsh,ah->bsa", x, w_w) + b_w)      # (B, S, A)
    scores = jnp.einsum("bsa,oa->bso", h, w_v)                 # (B, S, 1)
    att = jax.nn.softmax(scores, axis=1)
    return jnp.sum(x * att, axis=1)                            # (B, Hd)


if __name__ == "__main__":
    # Small shapes consistent with the module's forward:
    B, S, HIDDEN = 2, 8, 32
    ATTN = HIDDEN  # attention_dim defaults to hidden_dim

    key = jax.random.PRNGKey(0)
    kx, kw, kb, kv, kx2 = jax.random.split(key, 5)

    x = jax.random.normal(kx, (B, S, HIDDEN), dtype=jnp.float32)
    # Deterministic parameter init (synthetic, not a checkpoint load).
    w_w = 0.1 * jax.random.normal(kw, (ATTN, HIDDEN), dtype=jnp.float32)
    b_w = 0.1 * jax.random.normal(kb, (ATTN,), dtype=jnp.float32)
    w_v = 0.1 * jax.random.normal(kv, (1, ATTN), dtype=jnp.float32)

    out = jax.block_until_ready(mlp_attention(x, w_w, b_w, w_v))
    ref = mlp_attention_ref(x, w_w, b_w, w_v)
    assert out.shape == (B, HIDDEN)
    assert bool(jnp.all(jnp.isfinite(out))), "NaN/Inf in output"
    # Exact softmax reciprocal -> tight parity with the pure-JAX reference.
    assert jnp.allclose(out, ref, atol=1e-5, rtol=1e-5), "mismatch vs reference"

    # Ragged-last-block path: B not a multiple of block_b, no wrapper pad of x.
    # Garbage rows in the padded block must not leak NaNs into valid rows.
    B2 = 10
    x_r = jax.random.normal(kx2, (B2, S, HIDDEN), dtype=jnp.float32)
    out_r = jax.block_until_ready(mlp_attention(x_r, w_w, b_w, w_v, block_b=8))
    ref_r = mlp_attention_ref(x_r, w_w, b_w, w_v)
    assert out_r.shape == (B2, HIDDEN)
    assert bool(jnp.all(jnp.isfinite(out_r))), "NaN leaked into valid rows"
    assert jnp.allclose(out_r, ref_r, atol=1e-5, rtol=1e-5), "ragged-block mismatch"

    print("KERNEL_OK")
</pallas_src>

<mosaic_0001>
module attributes {stable_mosaic.version = 11 : i64} {
  func.func @mlp_attention_kernel(%arg0: i32, %arg1: memref<2x8x32xf32, #tpu.memory_space<vmem>>, %arg2: memref<32x32xf32, #tpu.memory_space<vmem>>, %arg3: memref<1x32xf32, #tpu.memory_space<vmem>>, %arg4: memref<1x32xf32, #tpu.memory_space<vmem>>, %arg5: memref<2x32xf32, #tpu.memory_space<vmem>>) attributes {dimension_semantics = [#tpu.dimension_semantics<parallel>], iteration_bounds = array<i64: 1>, scalar_prefetch = 0 : i64, scratch_operands = 0 : i64, tpu.core_type = #tpu.core_type<tc>, window_params = [{transform_indices = @transform_0, window_bounds = array<i64: 2, 8, 32>}, {pipeline_mode = #tpu.pipeline_mode<synchronous>, transform_indices = @transform_1, window_bounds = array<i64: 32, 32>}, {pipeline_mode = #tpu.pipeline_mode<synchronous>, transform_indices = @transform_2, window_bounds = array<i64: 1, 32>}, {pipeline_mode = #tpu.pipeline_mode<synchronous>, transform_indices = @transform_3, window_bounds = array<i64: 1, 32>}, {transform_indices = @transform_4, window_bounds = array<i64: 2, 32>}]} {
    %c0 = arith.constant 0 : index
    %c0_0 = arith.constant 0 : index
    %c0_1 = arith.constant 0 : index
    %0 = vector.load %arg1[%c0, %c0_0, %c0_1] : memref<2x8x32xf32, #tpu.memory_space<vmem>>, vector<2x8x32xf32>
    %1 = vector.shape_cast %0 : vector<2x8x32xf32> to vector<16x32xf32>
    %c0_2 = arith.constant 0 : index
    %c0_3 = arith.constant 0 : index
    %2 = vector.load %arg2[%c0_2, %c0_3] : memref<32x32xf32, #tpu.memory_space<vmem>>, vector<32x32xf32>
    %cst = arith.constant dense<0.000000e+00> : vector<16x32xf32>
    %3 = tpu.matmul %1, %2, %cst {dimension_numbers = #tpu.dot_dimension_numbers<[1], [1], [0], [0], [0, 0, 1, 0], [], []>} : vector<16x32xf32>, vector<32x32xf32>, vector<16x32xf32> -> vector<16x32xf32>
    %c0_4 = arith.constant 0 : index
    %c0_5 = arith.constant 0 : index
    %4 = vector.load %arg3[%c0_4, %c0_5] : memref<1x32xf32, #tpu.memory_space<vmem>>, vector<1x32xf32>
    %5 = vector.broadcast %4 : vector<1x32xf32> to vector<16x32xf32>
    %6 = arith.addf %3, %5 : vector<16x32xf32>
    %7 = math.tanh %6 : vector<16x32xf32>
    %8 = vector.shape_cast %7 : vector<16x32xf32> to vector<2x8x32xf32>
    %c0_6 = arith.constant 0 : index
    %c0_7 = arith.constant 0 : index
    %9 = vector.load %arg4[%c0_6, %c0_7] : memref<1x32xf32, #tpu.memory_space<vmem>>, vector<1x32xf32>
    %10 = vector.shape_cast %9 : vector<1x32xf32> to vector<1x1x32xf32>
    %11 = vector.broadcast %10 : vector<1x1x32xf32> to vector<2x8x32xf32>
    %12 = arith.mulf %8, %11 : vector<2x8x32xf32>
    %cst_8 = arith.constant dense<0.000000e+00> : vector<2x8xf32>
    %13 = vector.multi_reduction <add>, %12, %cst_8 [2] : vector<2x8x32xf32> to vector<2x8xf32>
    %cst_9 = arith.constant dense<0xFF800000> : vector<2xf32>
    %14 = vector.multi_reduction <maximumf>, %13, %cst_9 [1] : vector<2x8xf32> to vector<2xf32>
    %15 = vector.shape_cast %14 : vector<2xf32> to vector<2x1xf32>
    %16 = vector.broadcast %15 : vector<2x1xf32> to vector<2x8xf32>
    %17 = arith.subf %13, %16 : vector<2x8xf32>
    %18 = math.exp %17 : vector<2x8xf32>
    %cst_10 = arith.constant dense<0.000000e+00> : vector<2xf32>
    %19 = vector.multi_reduction <add>, %18, %cst_10 [1] : vector<2x8xf32> to vector<2xf32>
    %20 = vector.shape_cast %19 : vector<2xf32> to vector<2x1xf32>
    %21 = vector.broadcast %20 : vector<2x1xf32> to vector<2x8xf32>
    %22 = arith.divf %18, %21 : vector<2x8xf32>
    %23 = vector.shape_cast %22 : vector<2x8xf32> to vector<2x8x1xf32>
    %24 = vector.broadcast %23 : vector<2x8x1xf32> to vector<2x8x32xf32>
    %25 = arith.mulf %0, %24 : vector<2x8x32xf32>
    %cst_11 = arith.constant dense<0.000000e+00> : vector<2x32xf32>
    %26 = vector.multi_reduction <add>, %25, %cst_11 [1] : vector<2x8x32xf32> to vector<2x32xf32>
    %c0_12 = arith.constant 0 : index
    %c0_13 = arith.constant 0 : index
    %27 = vector.load %arg5[%c0_12, %c0_13] : memref<2x32xf32, #tpu.memory_space<vmem>>, vector<2x32xf32>
    tpu.vector_store %arg5[%c0_12, %c0_13], %26 {strides = array<i32>} : memref<2x32xf32, #tpu.memory_space<vmem>>, vector<2x32xf32>,
    return
  }
  func.func @transform_0(%arg0: i32) -> (i32, i32, i32) {
    %c0_i32 = arith.constant 0 : i32
    %c0_i32_0 = arith.constant 0 : i32
    %c0_i32_1 = arith.constant 0 : i32
    return %arg0, %c0_i32, %c0_i32_0 : i32, i32, i32
  }
  func.func @transform_1(%arg0: i32) -> (i32, i32) {
    %c0_i32 = arith.constant 0 : i32
    %c0_i32_0 = arith.constant 0 : i32
    %c0_i32_1 = arith.constant 0 : i32
    return %c0_i32, %c0_i32_0 : i32, i32
  }
  func.func @transform_2(%arg0: i32) -> (i32, i32) {
    %c0_i32 = arith.constant 0 : i32
    %c0_i32_0 = arith.constant 0 : i32
    %c0_i32_1 = arith.constant 0 : i32
    return %c0_i32, %c0_i32_0 : i32, i32
  }
  func.func @transform_3(%arg0: i32) -> (i32, i32) {
    %c0_i32 = arith.constant 0 : i32
    %c0_i32_0 = arith.constant 0 : i32
    %c0_i32_1 = arith.constant 0 : i32
    return %c0_i32, %c0_i32_0 : i32, i32
  }
  func.func @transform_4(%arg0: i32) -> (i32, i32) {
    %c0_i32 = arith.constant 0 : i32
    %c0_i32_0 = arith.constant 0 : i32
    return %arg0, %c0_i32 : i32, i32
  }
}

</mosaic_0001>

<llo_original>
// kernel: tpu_custom_call.1
$region0: #{tpu_custom_call.1}
  #allocation0 [shape = 'u32[]', space=smem, size = 0x4, offset = 0x4, fixed_abs, tag = 'smem constant byte address 0x4 - core index']
  #allocation1 [shape = 'u32[144,128]{1,0:T(1,128)}', space=vmem, size = 0x12000, scoped, tag = 'internal scratch']
  %s0 = inlined_call_operand.hbm [shape: f32[2,8,32], index: 0, kind: input, shape index: {}]
  %s1 = inlined_call_operand.hbm [shape: f32[32,32], index: 1, kind: input, shape index: {}]
  %s2 = inlined_call_operand.vmem [shape: f32[1,32], index: 2, kind: input, shape index: {}]
  %s3 = inlined_call_operand.vmem [shape: f32[1,32], index: 3, kind: input, shape index: {}]
  %s4 = inlined_call_operand.hbm [shape: f32[2,32], index: 4, kind: output, shape index: {}]
  %s5 = sld [smem:[#allocation0]]
  $region34: #{tpu_custom_call.1} parent=0
    _
  %s7 = ssub.s32 1, %s5
  %s8 = scalar_select 0, %s7, %s5
  $region1: #{tpu_custom_call.1} parent=0
    #allocation2 [shape = 'u8[8192]{0}', space=vmem, size = 0x2000, scoped, tag = 'input window, operand 0, single buffered']
    #allocation3 [shape = 's32[1]{0}', space=sflag, size = 0x4, scoped, tag = 'scoped memory for tpu_custom_call.1']
    #allocation4 [shape = 's32[1]{0}', space=sflag, size = 0x4, scoped, tag = 'scoped memory for tpu_custom_call.1']
    #allocation5 [shape = 'u8[16384]{0}', space=vmem, size = 0x4000, scoped, tag = 'input window, operand 1, single buffered']
    #allocation6 [shape = 's32[1]{0}', space=sflag, size = 0x4, scoped, tag = 'scoped memory for tpu_custom_call.1']
    #allocation7 [shape = 'u8[1024]{0}', space=vmem, size = 0x400, scoped, tag = 'output window, operand 0, single buffered']
    %9 = vsyncpa [#allocation3], 0
    %10 = vsyncpa [#allocation6], 0
    %11 = vsyncpa [#allocation4], 0
    // Predicated region
    $region2: #{tpu_custom_call.1} parent=1 // pred_check
      _
    $region3: #{tpu_custom_call.1} parent=1 // pred_check_branch
      %13 = sbr.rel (0) target = $region5
    $region4: #{tpu_custom_call.1} parent=1 // pred_region
      %s15 = ssub.s32 256, 256
      %16 = vsyncadd [#allocation3], %s15
      %s17 = sshll.u32 [#allocation2], 4
      %s18 = int_to_ptr.vmem [resolvable:$true] %s17
      %23 = dma.hbm_to_vmem [thread:$0]  %s0, 256, %s18, [#allocation3], 128, 128, 8
    $region5: #{tpu_custom_call.1} parent=1 // pred_fallthru
      _
    // Predicated region
    $region6: #{tpu_custom_call.1} parent=1 // pred_check
      _
    $region7: #{tpu_custom_call.1} parent=1 // pred_check_branch
      %25 = sbr.rel (0) target = $region9
    $region8: #{tpu_custom_call.1} parent=1 // pred_region
      %s27 = ssub.s32 512, 512
      %28 = vsyncadd [#allocation6], %s27
      %s29 = sshll.u32 [#allocation5], 4
      %s30 = int_to_ptr.vmem [resolvable:$true] %s29
      %35 = dma.hbm_to_vmem [thread:$0]  %s1, 512, %s30, [#allocation6], 128, 128, 8
    $region9: #{tpu_custom_call.1} parent=1 // pred_fallthru
      _
    // Predicated region
    $region10: #{tpu_custom_call.1} parent=1 // pred_check
      _
    $region11: #{tpu_custom_call.1} parent=1 // pred_check_branch
      %37 = sbr.rel (0) target = $region13
    $region12: #{tpu_custom_call.1} parent=1 // pred_region
      _
    $region13: #{tpu_custom_call.1} parent=1 // pred_fallthru
      _
    // Predicated region
    $region14: #{tpu_custom_call.1} parent=1 // pred_check
      _
    $region15: #{tpu_custom_call.1} parent=1 // pred_check_branch
      %39 = sbr.rel (0) target = $region17
    $region16: #{tpu_custom_call.1} parent=1 // pred_region
      _
    $region17: #{tpu_custom_call.1} parent=1 // pred_fallthru
      _
    // Predicated region
    $region18: #{tpu_custom_call.1} parent=1 // pred_check
      _
    $region19: #{tpu_custom_call.1} parent=1 // pred_check_branch
      %41 = sbr.rel (0) target = $region21
    $region20: #{tpu_custom_call.1} parent=1 // pred_region
      %42 = dma.done [#allocation3], 256
    $region21: #{tpu_custom_call.1} parent=1 // pred_fallthru
      _
    // Predicated region
    $region22: #{tpu_custom_call.1} parent=1 // pred_check
      _
    $region23: #{tpu_custom_call.1} parent=1 // pred_check_branch
      %44 = sbr.rel (0) target = $region25
    $region24: #{tpu_custom_call.1} parent=1 // pred_region
      %45 = dma.done [#allocation6], 512
    $region25: #{tpu_custom_call.1} parent=1 // pred_fallthru
      _
    %v46 = vld [vmem:[#allocation2] sm:$0xff]
    %v47 = vld [vmem:[#allocation2 + $0x8] sm:$0xff]
    %v48 = vld [vmem:[#allocation5] sm:$0xff]
    %v49 = vld [vmem:[#allocation5 + $0x8] sm:$0xff]
    %v50 = vld [vmem:[#allocation5 + $0x10] sm:$0xff]
    %v51 = vld [vmem:[#allocation5 + $0x18] sm:$0xff]
    %v52 = vld [vmem:[%s2] sm:$0x1]
    %v54 = vlaneseq
    %v55 = vshrl.u32 %v54, 7
    %v56 = vsub.s32 0, %v55
    %v57 = vrot.slane %v52, %v56
    %vm59 = vcmask 261120
    %v61 = vsel %vm59, %v46, 0
    %v64 = vsel %vm59, %v47, 0
    %v67 = vsel %vm59, %v48, 0
    %v70 = vsel %vm59, %v49, 0
    %v73 = vsel %vm59, %v50, 0
    %v76 = vsel %vm59, %v51, 0
    %78 = vmatprep.subr.mxu0 0.0
    %79 = vmatpush1.xpose.msra.mxu0 %v67
    %80 = vmatprep.subr.mxu0 0.0
    %81 = vmatpush1.xpose.msra.mxu0 %v70
    %82 = vmatprep.subr.mxu0 0.0
    %83 = vmatpush1.xpose.msra.mxu0 %v73
    %84 = vmatprep.subr.mxu0 0.0
    %85 = vmatpush1.xpose.msra.mxu0 %v76
    %86 = vmatprep.subr.mxu0 0.0
    %87 = vmatpush1.xpose.msra.mxu0 0.0
    %88 = vmatprep.subr.mxu0 0.0
    %89 = vmatpush1.xpose.msra.mxu0 0.0
    %90 = vmatprep.subr.mxu0 0.0
    %91 = vmatpush1.xpose.msra.mxu0 0.0
    %92 = vmatprep.subr.mxu0 0.0
    %93 = vmatpush1.xpose.msra.mxu0 0.0
    %94 = vmatprep.subr.mxu0 0.0
    %95 = vmatpush1.xpose.msra.mxu0 0.0
    %96 = vmatprep.subr.mxu0 0.0
    %97 = vmatpush1.xpose.msra.mxu0 0.0
    %98 = vmatprep.subr.mxu0 0.0
    %99 = vmatpush1.xpose.msra.mxu0 0.0
    %100 = vmatprep.subr.mxu0 0.0
    %101 = vmatpush1.xpose.msra.mxu0 0.0
    %102 = vmatprep.subr.mxu0 0.0
    %103 = vmatpush1.xpose.msra.mxu0 0.0
    %104 = vmatprep.subr.mxu0 0.0
    %105 = vmatpush1.xpose.msra.mxu0 0.0
    %106 = vmatprep.subr.mxu0 0.0
    %107 = vmatpush1.xpose.msra.mxu0 0.0
    %108 = vmatprep.subr.mxu0 0.0
    %109 = vmatpush1.xpose.msra.mxu0 0.0
    %110 = vmatprep.subr.mxu0 0.0
    %111 = vmatpush1.xpose.msra.mxu0 0.0
    %112 = vmatprep.subr.mxu0 0.0
    %113 = vmatpush1.xpose.msra.mxu0 0.0
    %114 = vmatprep.subr.mxu0 0.0
    %115 = vmatpush1.xpose.msra.mxu0 0.0
    %116 = vmatprep.subr.mxu0 0.0
    %117 = vmatpush1.xpose.msra.mxu0 0.0
    %118 = vmatprep.subr.mxu0 0.0
    %119 = vmatpush1.xpose.msra.mxu0 0.0
    %120 = vmatprep.subr.mxu0 0.0
    %121 = vmatpush1.xpose.msra.mxu0 0.0
    %122 = vmatprep.subr.mxu0 0.0
    %123 = vmatpush1.xpose.msra.mxu0 0.0
    %124 = vmatprep.subr.mxu0 0.0
    %125 = vmatpush1.xpose.msra.mxu0 0.0
    %126 = vmatprep.subr.mxu0 0.0
    %127 = vmatpush1.xpose.msra.mxu0 0.0
    %128 = vmatprep.subr.mxu0 0.0
    %129 = vmatpush1.xpose.msra.mxu0 0.0
    %130 = vmatprep.subr.mxu0 0.0
    %131 = vmatpush1.xpose.msra.mxu0 0.0
    %132 = vmatprep.subr.mxu0 0.0
    %133 = vmatpush1.xpose.msra.mxu0 0.0
    %134 = vmatprep.subr.mxu0 0.0
    %135 = vmatpush1.xpose.msra.mxu0 0.0
    %136 = vmatprep.subr.mxu0 0.0
    %137 = vmatpush1.xpose.msra.mxu0 0.0
    %138 = vmatprep.subr.mxu0 0.0
    %139 = vmatpush1.xpose.msra.mxu0 0.0
    %140 = vmatprep.subr.mxu0 0.0
    %141 = vmatpush1.xpose.msra.mxu0 0.0
    %142 = vmatprep.mubr.f32.mxu0 0.0
    %143 = vmatmul.mubr.f32.gmra.mrb[0].mxu0 %v61
    %v144 = vpop.f32.mrb[0].mxu0
    %v145 = vadd.f32 %v57, %v144
    %v146 = vpop.f32.mrb[0].mxu0
    %147 = vmatprep.mubr.f32.mxu0 0.0
    %148 = vmatmul.mubr.f32.gmra.mrb[0].mxu0 %v64
    %v149 = vpop.f32.mrb[0].mxu0
    %v150 = vadd.f32 %v57, %v149
    %v151 = vpop.f32.mrb[0].mxu0
    %152 = vdwg.mxu0
    %v153 = vtanh.pop %v145
    %v154 = vtanh.pop %v150
    %v155 = vld [vmem:[%s3] sm:$0x1]
    %v157 = vlaneseq
    %v158 = vshrl.u32 %v157, 7
    %v159 = vsub.s32 0, %v158
    %v160 = vrot.slane %v155, %v159
    %v162 = vmul.f32 %v153, %v160
    %v163 = vmul.f32 %v154, %v160
    %v164 = vsel %vm59, %v162, 0.0
    %165 = vadd.xlane.f32.xlu0 %v164
    %v166 = vpop.xlane.xlu0 %165
    %v167 = vsel %vm59, %v163, 0.0
    %168 = vadd.xlane.f32.xlu0 %v167
    %v169 = vpop.xlane.xlu0 %168
    %v172 = vlaneseq
    %v173 = vand.u32 %v172, 127
    %v174 = vlaneseq
    %v175 = vshrl.u32 %v174, 7
    %v176 = vsub.s32 %v173, %v175
    %v177 = vrot.slane %v166, %v176
    %v178 = vlaneseq
    %v179 = vshrl.u32 %v178, 7
    %v180 = vsub.s32 %v173, %v179
    %v181 = vrot.slane %v169, %v180
    %vm182 = vcmask 1041409
    %v183 = vsel %vm182, %v181, %v177
    %vm185 = vcmask 58368
    %v186 = vsel %vm185, %v183, -inf
    %187 = vmax.xlane.f32.xlu0 %v186
    %v188 = vpop.xlane.xlu0 %187
    %v190 = vlaneseq
    %v191 = vshrl.u32 %v190, 7
    %v192 = vsub.s32 0, %v191
    %v193 = vrot.slane %v188, %v192
    %v194 = vlaneseq
    %v195 = vshrl.u32 %v194, 7
    %v196 = vsub.s32 1, %v195
    %v197 = vrot.slane %v188, %v196
    %v200 = vsub.f32 %v166, %v193
    %v201 = vsub.f32 %v169, %v197
    %v202 = vmul.f32 %v200, 1.442695
    %v203 = vpow.pop %v202
    %v204 = vmul.f32 %v201, 1.442695
    %v205 = vpow.pop %v204
    %208 = vset.pattern.permute.xlu0 0
    %209 = vperm.xlu0 %208, %v203
    %v210 = vpop.permute.xlu0 %209
    %211 = vset.pattern.permute.xlu0 0
    %212 = vperm.xlu0 %211, %v205
    %v213 = vpop.permute.xlu0 %212
    %v214 = vlaneseq
    %v215 = vshrl.u32 %v214, 7
    %v216 = vsub.s32 %v173, %v215
    %v217 = vrot.slane %v210, %v216
    %v218 = vlaneseq
    %v219 = vshrl.u32 %v218, 7
    %v220 = vsub.s32 %v173, %v219
    %v221 = vrot.slane %v213, %v220
    %v222 = vsel %vm182, %v221, %v217
    %v224 = vsel %vm185, %v222, 0.0
    %225 = vadd.xlane.f32.xlu0 %v224
    %v226 = vpop.xlane.xlu0 %225
    %v228 = vlaneseq
    %v229 = vshrl.u32 %v228, 7
    %v230 = vsub.s32 0, %v229
    %v231 = vrot.slane %v226, %v230
    %v232 = vlaneseq
    %v233 = vshrl.u32 %v232, 7
    %v234 = vsub.s32 1, %v233
    %v235 = vrot.slane %v226, %v234
    %v238 = vrcp.pop %v231
    %v239 = vmul.f32 %v203, %v238
    %v240 = vrcp.pop %v235
    %v241 = vmul.f32 %v205, %v240
    %243 = vset.pattern.permute.xlu0 0
    %244 = vperm.xlu0 %243, %v239
    %v245 = vpop.permute.xlu0 %244
    %248 = vset.pattern.permute.xlu0 0
    %249 = vperm.xlu0 %248, %v241
    %v250 = vpop.permute.xlu0 %249
    %v252 = vmul.f32 %v46, %v245
    %v253 = vmul.f32 %v47, %v250
    %v254 = vsel %vm59, %v252, 0.0
    %v255 = vrot.slane %v254, 4
    %v256 = vadd.f32 %v254, %v255
    %v257 = vrot.slane %v256, 2
    %v258 = vadd.f32 %v256, %v257
    %v259 = vrot.slane %v258, 1
    %v260 = vadd.f32 %v258, %v259
    %v261 = vsel %vm59, %v253, 0.0
    %v262 = vrot.slane %v261, 4
    %v263 = vadd.f32 %v261, %v262
    %v264 = vrot.slane %v263, 2
    %v265 = vadd.f32 %v263, %v264
    %v266 = vrot.slane %v265, 1
    %v267 = vadd.f32 %v265, %v266
    %v270 = vsel %vm182, %v267, %v260
    %vm272 = vcmask 254976
    %273 = vst.msk [vmem:[#allocation7] sm:$0x3] %vm272, %v270
    // Predicated region
    $region26: #{tpu_custom_call.1} parent=1 // pred_check
      _
    $region27: #{tpu_custom_call.1} parent=1 // pred_check_branch
      %275 = sbr.rel (0) target = $region29
    $region28: #{tpu_custom_call.1} parent=1 // pred_region
      %s277 = ssub.s32 32, 32
      %278 = vsyncadd [#allocation4], %s277
      %s280 = sshll.u32 [#allocation7], 4
      %s281 = int_to_ptr.vmem [resolvable:$true] %s280
      %283 = dma.vmem_to_hbm [thread:$0]  %s281, 32, %s4, [#allocation4]
    $region29: #{tpu_custom_call.1} parent=1 // pred_fallthru
      _
    // Predicated region
    $region30: #{tpu_custom_call.1} parent=1 // pred_check
      _
    $region31: #{tpu_custom_call.1} parent=1 // pred_check_branch
      %285 = sbr.rel (0) target = $region33
    $region32: #{tpu_custom_call.1} parent=1 // pred_region
      %286 = dma.done [#allocation4], 32
    $region33: #{tpu_custom_call.1} parent=1 // pred_fallthru
      _
    %287 = vsyncpa [#allocation3], 1
    %288 = vsyncpa [#allocation6], 1
    %289 = vsyncpa [#allocation4], 1

</llo_original>
